<compile_context>
chip_gen: v6e
topology: v6e:2x2x1
jax: 0.10.0
libtpu: 0.0.40
codegen_flags: <defaults>
</compile_context>

<pallas_src>
import math
from functools import partial

import jax
import jax.numpy as jnp
import numpy as np
from jax.experimental import pallas as pl
from jax.experimental.pallas import tpu as pltpu


def _knife_kernel(z_ref, a_ref, bias_ref, seg_ref, w_ref, out_ref):
    """Single-invocation kernel (all operands whole-array resident in VMEM).

    z_ref    : [N, d]    raw input z_d
    a_ref    : [d, K*d]  stacked affine maps A_k = diag(var_k) @ (I + L_k)^T
    bias_ref : [1, K*d]  concat_k( -mu_k @ A_k )
    seg_ref  : [K*d, K]  block segment-sum matrix with -0.5 baked in
    w_ref    : [1, K]    log_softmax(weigh) + logdet + logC (K-invariant folds)
    out_ref  : [1, 1]    mean(-logpdf)
    """
    n = z_ref.shape[0]

    # Per-component y_k = (I + L_k) @ diag(var_k) @ (z - mu_k), all K at once.
    y = jnp.dot(z_ref[...], a_ref[...],
                preferred_element_type=jnp.float32) + bias_ref[...]      # [N, K*d]

    # -0.5 * per-component sum of squares (scale baked into seg) + log-weights.
    logits = jnp.dot(y * y, seg_ref[...],
                     preferred_element_type=jnp.float32) + w_ref[...]    # [N, K]

    # logsumexp over the K (lane) axis.
    m = jnp.max(logits, axis=-1, keepdims=True)                          # [N, 1]
    lse = m + jnp.log(jnp.sum(jnp.exp(logits - m), axis=-1, keepdims=True))

    # mean over N of -(logC + logsumexp); logC already folded into w.
    out_ref[...] = -(jnp.sum(lse, axis=0, keepdims=True) / float(n))     # [1, 1]


@partial(jax.jit)
def knife_forward(z_c, z_d, params):
    """KNIFE.forward(z_c, z_d): z_c is unused (only the marginal entropy of z_d)."""
    del z_c
    means = params["means"].astype(jnp.float32)     # [K, d]
    logvar = params["logvar"].astype(jnp.float32)   # [1, K, d]
    tri = params["tri"].astype(jnp.float32)         # [1, K, d, d]
    weigh = params["weigh"].astype(jnp.float32)     # [1, K]

    K, d = means.shape
    kd = K * d
    n = z_d.shape[0]

    # ---- K-invariant precompute (fused by jit, single dispatch overall) ----
    var = jnp.exp(logvar).reshape(K, d)                                   # [K, d]
    L = jnp.tril(tri.reshape(K, d, d), k=-1)                              # [K, d, d]
    ILt = jnp.transpose(jnp.eye(d, dtype=jnp.float32)[None] + L,
                        (0, 2, 1))                                        # (I+L_k)^T
    A = var[:, :, None] * ILt                                             # diag(var_k)@(I+L_k)^T
    a_stack = jnp.transpose(A, (1, 0, 2)).reshape(d, kd)                  # [d, K*d]
    bias = jnp.einsum("ki,kij->kj", -means, A).reshape(1, kd)             # [1, K*d]

    # Segment-sum matrix with the Gaussian -1/2 baked in.
    seg = -0.5 * jnp.repeat(jnp.eye(K, dtype=jnp.float32), d, axis=0)     # [K*d, K]

    # Fold log_softmax(weigh), logdet and logC into one lane-dense bias.
    w = jax.nn.log_softmax(weigh, axis=1).reshape(1, K)
    logdet = jnp.sum(jnp.log(jnp.abs(var) + 1e-8), axis=-1).reshape(1, K)
    logC = -d / 2.0 * math.log(2.0 * math.pi)
    w_full = w + logdet + logC                                            # [1, K]

    z = z_d.astype(jnp.float32)                                           # [N, d]

    # TODO(synk): for large N, add a leading "parallel" batch grid axis with
    # per-tile partial sums (keeps v7x's 64 MiB VMEM happy, uses both TCs) and
    # consider bf16 MXU inputs on v6e/v7x; unnecessary at this problem size.
    vmem = pl.BlockSpec(memory_space=pltpu.MemorySpace.VMEM)
    out = pl.pallas_call(
        _knife_kernel,
        out_shape=jax.ShapeDtypeStruct((1, 1), jnp.float32),
        in_specs=[vmem, vmem, vmem, vmem, vmem],
        out_specs=vmem,
    )(z, a_stack, bias, seg, w_full)
    return out[0, 0]


def knife_reference(z_d, params):
    """Pure-JAX transcription of MargKernel.logpdf / KNIFE.forward."""
    means, logvar, tri, weigh = (params["means"], params["logvar"],
                                 params["tri"], params["weigh"])
    d = means.shape[1]
    x = z_d[:, None, :]
    w = jax.nn.log_softmax(weigh, axis=1)
    y = x - means
    var = jnp.exp(logvar)
    y = y * var
    L = jnp.tril(tri, k=-1)
    y = y + jnp.squeeze(jnp.matmul(L, y[:, :, :, None]), 3)
    y = jnp.sum(y ** 2, axis=2)
    y = -y / 2 + jnp.sum(jnp.log(jnp.abs(var) + 1e-8), axis=-1) + w
    y = jax.nn.logsumexp(y, axis=-1)
    logC = -d / 2 * np.log(2 * np.pi)
    return jnp.mean(-(logC + y))


if __name__ == "__main__":
    # Small shapes implied by the module: args.optimize_mu=True,
    # args.marg_modes=K=8, zc_dim=d=32, batch N=8.
    N, K, d = 8, 8, 32
    init_std = 0.01

    key = jax.random.PRNGKey(0)
    k1, k2, k3, k4, k5 = jax.random.split(key, 5)
    params = {
        "means": init_std * jax.random.normal(k1, (K, d), jnp.float32),
        "logvar": init_std * jax.random.normal(k2, (1, K, d), jnp.float32),
        "tri": init_std * jax.random.normal(k3, (1, K, d, d), jnp.float32),
        "weigh": jnp.ones((1, K), jnp.float32),
    }
    z_c = jax.random.normal(k4, (N, d), jnp.float32)   # unused by forward
    z_d = jax.random.normal(k5, (N, d), jnp.float32)

    out = jax.block_until_ready(knife_forward(z_c, z_d, params))
    ref = jax.block_until_ready(knife_reference(z_d, params))
    assert np.allclose(np.asarray(out), np.asarray(ref), rtol=1e-4, atol=1e-4), (
        float(out), float(ref))
    print("KERNEL_OK")
</pallas_src>

<mosaic_0001>
module attributes {stable_mosaic.version = 11 : i64} {
  func.func @_knife_kernel(%arg0: memref<8x32xf32, #tpu.memory_space<vmem>>, %arg1: memref<32x256xf32, #tpu.memory_space<vmem>>, %arg2: memref<1x256xf32, #tpu.memory_space<vmem>>, %arg3: memref<256x8xf32, #tpu.memory_space<vmem>>, %arg4: memref<1x8xf32, #tpu.memory_space<vmem>>, %arg5: memref<1x1xf32, #tpu.memory_space<vmem>>) attributes {dimension_semantics = [], scalar_prefetch = 0 : i64, scratch_operands = 0 : i64, tpu.core_type = #tpu.core_type<tc>} {
    %c0 = arith.constant 0 : index
    %c0_0 = arith.constant 0 : index
    %0 = vector.load %arg0[%c0, %c0_0] : memref<8x32xf32, #tpu.memory_space<vmem>>, vector<8x32xf32>
    %c0_1 = arith.constant 0 : index
    %c0_2 = arith.constant 0 : index
    %1 = vector.load %arg1[%c0_1, %c0_2] : memref<32x256xf32, #tpu.memory_space<vmem>>, vector<32x256xf32>
    %cst = arith.constant dense<0.000000e+00> : vector<8x256xf32>
    %2 = tpu.matmul %0, %1, %cst {dimension_numbers = #tpu.dot_dimension_numbers<[1], [0], [0], [1], [0, 0, 1, 1], [], []>} : vector<8x32xf32>, vector<32x256xf32>, vector<8x256xf32> -> vector<8x256xf32>
    %c0_3 = arith.constant 0 : index
    %c0_4 = arith.constant 0 : index
    %3 = vector.load %arg2[%c0_3, %c0_4] : memref<1x256xf32, #tpu.memory_space<vmem>>, vector<1x256xf32>
    %4 = vector.broadcast %3 : vector<1x256xf32> to vector<8x256xf32>
    %5 = arith.addf %2, %4 : vector<8x256xf32>
    %6 = arith.mulf %5, %5 : vector<8x256xf32>
    %c0_5 = arith.constant 0 : index
    %c0_6 = arith.constant 0 : index
    %7 = vector.load %arg3[%c0_5, %c0_6] : memref<256x8xf32, #tpu.memory_space<vmem>>, vector<256x8xf32>
    %cst_7 = arith.constant dense<0.000000e+00> : vector<8x8xf32>
    %8 = tpu.matmul %6, %7, %cst_7 {dimension_numbers = #tpu.dot_dimension_numbers<[1], [0], [0], [1], [0, 0, 1, 1], [], []>} : vector<8x256xf32>, vector<256x8xf32>, vector<8x8xf32> -> vector<8x8xf32>
    %c0_8 = arith.constant 0 : index
    %c0_9 = arith.constant 0 : index
    %9 = vector.load %arg4[%c0_8, %c0_9] : memref<1x8xf32, #tpu.memory_space<vmem>>, vector<1x8xf32>
    %10 = vector.broadcast %9 : vector<1x8xf32> to vector<8x8xf32>
    %11 = arith.addf %8, %10 : vector<8x8xf32>
    %cst_10 = arith.constant dense<0xFF800000> : vector<8xf32>
    %12 = vector.multi_reduction <maximumf>, %11, %cst_10 [1] : vector<8x8xf32> to vector<8xf32>
    %13 = vector.shape_cast %12 : vector<8xf32> to vector<8x1xf32>
    %14 = vector.broadcast %13 : vector<8x1xf32> to vector<8x8xf32>
    %15 = arith.subf %11, %14 : vector<8x8xf32>
    %16 = math.exp %15 : vector<8x8xf32>
    %cst_11 = arith.constant dense<0.000000e+00> : vector<8xf32>
    %17 = vector.multi_reduction <add>, %16, %cst_11 [1] : vector<8x8xf32> to vector<8xf32>
    %18 = vector.shape_cast %17 : vector<8xf32> to vector<8x1xf32>
    %19 = math.log %18 : vector<8x1xf32>
    %20 = arith.addf %13, %19 : vector<8x1xf32>
    %cst_12 = arith.constant dense<0.000000e+00> : vector<1xf32>
    %21 = vector.multi_reduction <add>, %20, %cst_12 [0] : vector<8x1xf32> to vector<1xf32>
    %22 = vector.shape_cast %21 : vector<1xf32> to vector<1x1xf32>
    %cst_13 = arith.constant 8.000000e+00 : f32
    %23 = vector.broadcast %cst_13 : f32 to vector<1x1xf32>
    %24 = arith.divf %22, %23 : vector<1x1xf32>
    %cst_14 = arith.constant 0.000000e+00 : f32
    %25 = vector.broadcast %cst_14 : f32 to vector<1x1xf32>
    %26 = arith.subf %25, %24 : vector<1x1xf32>
    %c0_15 = arith.constant 0 : index
    %c0_16 = arith.constant 0 : index
    %27 = vector.load %arg5[%c0_15, %c0_16] : memref<1x1xf32, #tpu.memory_space<vmem>>, vector<1x1xf32>
    tpu.vector_store %arg5[%c0_15, %c0_16], %26 {strides = array<i32>} : memref<1x1xf32, #tpu.memory_space<vmem>>, vector<1x1xf32>,
    return
  }
}

</mosaic_0001>

<llo_original>
// kernel: neg.1
$region0: #{neg.1}
  #allocation2 [shape = 's32[1]{0}', space=sflag, size = 0x4, scoped, tag = 'scoped memory for neg.1']
  %s0 = inlined_call_operand.hbm [shape: f32[8,32], index: 0, kind: input, shape index: {}]
  %s1 = inlined_call_operand.vmem [shape: f32[8,32], index: 1, kind: output, shape index: {}]
  $region1: #{neg.1} parent=0
    #allocation0 [shape = 'u8[4096]{0}', space=vmem, size = 0x1000, scoped, tag = 'operand span for operand 0']
    #allocation1 [shape = 's32[1]{0}', space=sflag, size = 0x4, scoped, tag = 'scoped memory for neg.1']
    %2 = vsyncpa [#allocation1], 0
    %s4 = ssub.s32 128, 128
    %5 = vsyncadd [#allocation1], %s4
    %s7 = sshll.u32 [#allocation0], 4
    %s8 = int_to_ptr.vmem [resolvable:$true] %s7
    %10 = dma.hbm_to_vmem [thread:$0]  %s0, 128, %s8, [#allocation1]
    %11 = dma.done [#allocation1], 128
    %v12 = vld [vmem:[#allocation0] sm:$0xff]
    %13 = xla_tuple %v12
    %14 = xla_tuple %13
    %v15 = vxor.u32 %v12, 2147483648
    %16 = xla_tuple %v15
    %17 = vst [vmem:[%s1] sm:$0xff] %v15
    %18 = vsyncpa [#allocation1], 1

// kernel: knife_forward.1
$region0: #{knife_forward.1}
  #allocation0 [shape = 'u32[]', space=smem, size = 0x4, offset = 0x4, fixed_abs, tag = 'smem constant byte address 0x4 - core index']
  #allocation1 [shape = 'u32[144,128]{1,0:T(1,128)}', space=vmem, size = 0x12000, scoped, tag = 'internal scratch']
  %s0 = inlined_call_operand.vmem [shape: f32[8,32], index: 0, kind: input, shape index: {}]
  %s1 = inlined_call_operand.vmem [shape: f32[32,256], index: 1, kind: input, shape index: {}]
  %s2 = inlined_call_operand.vmem [shape: f32[1,256], index: 2, kind: input, shape index: {}]
  %s3 = inlined_call_operand.vmem [shape: f32[256,8], index: 3, kind: input, shape index: {}]
  %s4 = inlined_call_operand.vmem [shape: f32[1,8], index: 4, kind: input, shape index: {}]
  %s5 = inlined_call_operand.hbm [shape: f32[1,1], index: 5, kind: output, shape index: {}]
  %s6 = sld [smem:[#allocation0]]
  $region30: #{knife_forward.1} parent=0
    _
  %s8 = ssub.s32 1, %s6
  %s9 = scalar_select 0, %s8, %s6
  $region1: #{knife_forward.1} parent=0
    #allocation2 [shape = 'u8[512]{0}', space=vmem, size = 0x400, scoped, tag = 'output window, operand 0, single buffered']
    #allocation3 [shape = 's32[1]{0}', space=sflag, size = 0x4, scoped, tag = 'scoped memory for knife_forward.1']
    %10 = vsyncpa [#allocation3], 0
    // Predicated region
    $region2: #{knife_forward.1} parent=1 // pred_check
      _
    $region3: #{knife_forward.1} parent=1 // pred_check_branch
      %12 = sbr.rel (0) target = $region5
    $region4: #{knife_forward.1} parent=1 // pred_region
      _
    $region5: #{knife_forward.1} parent=1 // pred_fallthru
      _
    // Predicated region
    $region6: #{knife_forward.1} parent=1 // pred_check
      _
    $region7: #{knife_forward.1} parent=1 // pred_check_branch
      %14 = sbr.rel (0) target = $region9
    $region8: #{knife_forward.1} parent=1 // pred_region
      _
    $region9: #{knife_forward.1} parent=1 // pred_fallthru
      _
    // Predicated region
    $region10: #{knife_forward.1} parent=1 // pred_check
      _
    $region11: #{knife_forward.1} parent=1 // pred_check_branch
      %16 = sbr.rel (0) target = $region13
    $region12: #{knife_forward.1} parent=1 // pred_region
      _
    $region13: #{knife_forward.1} parent=1 // pred_fallthru
      _
    // Predicated region
    $region14: #{knife_forward.1} parent=1 // pred_check
      _
    $region15: #{knife_forward.1} parent=1 // pred_check_branch
      %18 = sbr.rel (0) target = $region17
    $region16: #{knife_forward.1} parent=1 // pred_region
      _
    $region17: #{knife_forward.1} parent=1 // pred_fallthru
      _
    // Predicated region
    $region18: #{knife_forward.1} parent=1 // pred_check
      _
    $region19: #{knife_forward.1} parent=1 // pred_check_branch
      %20 = sbr.rel (0) target = $region21
    $region20: #{knife_forward.1} parent=1 // pred_region
      _
    $region21: #{knife_forward.1} parent=1 // pred_fallthru
      _
    %v21 = vld [vmem:[%s0] sm:$0xff]
    %v22 = vld [vmem:[%s1] sm:$0xff]
    %v23 = vld [vmem:[%s1 + $0x8] sm:$0xff]
    %v24 = vld [vmem:[%s1 + $0x10] sm:$0xff]
    %v25 = vld [vmem:[%s1 + $0x18] sm:$0xff]
    %v26 = vld [vmem:[%s1 + $0x20] sm:$0xff]
    %v27 = vld [vmem:[%s1 + $0x28] sm:$0xff]
    %v28 = vld [vmem:[%s1 + $0x30] sm:$0xff]
    %v29 = vld [vmem:[%s1 + $0x38] sm:$0xff]
    %v30 = vld [vmem:[%s2] sm:$0x3]
    %v32 = vlaneseq
    %v33 = vshrl.u32 %v32, 7
    %v34 = vsub.s32 0, %v33
    %v35 = vrot.slane %v30, %v34
    %v36 = vlaneseq
    %v37 = vshrl.u32 %v36, 7
    %v38 = vsub.s32 1, %v37
    %v39 = vrot.slane %v30, %v38
    %vm42 = vcmask 261120
    %v44 = vsel %vm42, %v21, 0
    %46 = vmatprep.subr.mxu0 0.0
    %47 = vmatpush1.msra.mxu0 0.0
    %48 = vmatprep.subr.mxu0 0.0
    %49 = vmatpush1.msra.mxu0 0.0
    %50 = vmatprep.subr.mxu0 0.0
    %51 = vmatpush1.msra.mxu0 0.0
    %52 = vmatprep.subr.mxu0 0.0
    %53 = vmatpush1.msra.mxu0 0.0
    %54 = vmatprep.subr.mxu0 0.0
    %55 = vmatpush1.msra.mxu0 0.0
    %56 = vmatprep.subr.mxu0 0.0
    %57 = vmatpush1.msra.mxu0 0.0
    %58 = vmatprep.subr.mxu0 0.0
    %59 = vmatpush1.msra.mxu0 0.0
    %60 = vmatprep.subr.mxu0 0.0
    %61 = vmatpush1.msra.mxu0 0.0
    %62 = vmatprep.subr.mxu0 0.0
    %63 = vmatpush1.msra.mxu0 0.0
    %64 = vmatprep.subr.mxu0 0.0
    %65 = vmatpush1.msra.mxu0 0.0
    %66 = vmatprep.subr.mxu0 0.0
    %67 = vmatpush1.msra.mxu0 0.0
    %68 = vmatprep.subr.mxu0 0.0
    %69 = vmatpush1.msra.mxu0 0.0
    %70 = vmatprep.subr.mxu0 %v29
    %71 = vmatpush1.msra.mxu0 %v28
    %72 = vmatprep.subr.mxu0 %v27
    %73 = vmatpush1.msra.mxu0 %v26
    %74 = vmatprep.subr.mxu0 %v25
    %75 = vmatpush1.msra.mxu0 %v24
    %76 = vmatprep.subr.mxu0 %v23
    %77 = vmatpush1.msra.mxu0 %v22
    %78 = vmatprep.subr.mxu0 0.0
    %79 = vmatpush2.msra.mxu0 0.0
    %80 = vmatprep.subr.mxu0 0.0
    %81 = vmatpush2.msra.mxu0 0.0
    %82 = vmatprep.subr.mxu0 0.0
    %83 = vmatpush2.msra.mxu0 0.0
    %84 = vmatprep.subr.mxu0 0.0
    %85 = vmatpush2.msra.mxu0 0.0
    %86 = vmatprep.subr.mxu0 0.0
    %87 = vmatpush2.msra.mxu0 0.0
    %88 = vmatprep.subr.mxu0 0.0
    %89 = vmatpush2.msra.mxu0 0.0
    %90 = vmatprep.subr.mxu0 0.0
    %91 = vmatpush2.msra.mxu0 0.0
    %92 = vmatprep.subr.mxu0 0.0
    %93 = vmatpush2.msra.mxu0 0.0
    %94 = vmatprep.subr.mxu0 0.0
    %95 = vmatpush2.msra.mxu0 0.0
    %96 = vmatprep.subr.mxu0 0.0
    %97 = vmatpush2.msra.mxu0 0.0
    %98 = vmatprep.subr.mxu0 0.0
    %99 = vmatpush2.msra.mxu0 0.0
    %100 = vmatprep.subr.mxu0 0.0
    %101 = vmatpush2.msra.mxu0 0.0
    %102 = vmatprep.subr.mxu0 0.0
    %103 = vmatpush2.msra.mxu0 0.0
    %104 = vmatprep.subr.mxu0 0.0
    %105 = vmatpush2.msra.mxu0 0.0
    %106 = vmatprep.subr.mxu0 0.0
    %107 = vmatpush2.msra.mxu0 0.0
    %108 = vmatprep.subr.mxu0 0.0
    %109 = vmatpush2.msra.mxu0 0.0
    %110 = vmatprep.mubr.f32.mxu0 0.0
    %111 = vmatmul.mubr.f32.gmra.mxu0 %v44
    %v112 = vpop.f32.mrf.mxu0
    %v113 = vadd.f32 %v35, %v112
    %v114 = vpop.f32.mrf.mxu0
    %v115 = vadd.f32 %v39, %v114
    %116 = vdwg.mxu0
    %v117 = vmul.f32 %v113, %v113
    %v118 = vmul.f32 %v115, %v115
    %v119 = vld [vmem:[%s3] sm:$0xff]
    %v120 = vld [vmem:[%s3 + $0x8] sm:$0xff]
    %v121 = vld [vmem:[%s3 + $0x10] sm:$0xff]
    %v122 = vld [vmem:[%s3 + $0x18] sm:$0xff]
    %v123 = vld [vmem:[%s3 + $0x20] sm:$0xff]
    %v124 = vld [vmem:[%s3 + $0x28] sm:$0xff]
    %v125 = vld [vmem:[%s3 + $0x30] sm:$0xff]
    %v126 = vld [vmem:[%s3 + $0x38] sm:$0xff]
    %v127 = vld [vmem:[%s3 + $0x40] sm:$0xff]
    %v128 = vld [vmem:[%s3 + $0x48] sm:$0xff]
    %v129 = vld [vmem:[%s3 + $0x50] sm:$0xff]
    %v130 = vld [vmem:[%s3 + $0x58] sm:$0xff]
    %v131 = vld [vmem:[%s3 + $0x60] sm:$0xff]
    %v132 = vld [vmem:[%s3 + $0x68] sm:$0xff]
    %v133 = vld [vmem:[%s3 + $0x70] sm:$0xff]
    %v134 = vld [vmem:[%s3 + $0x78] sm:$0xff]
    %v135 = vld [vmem:[%s3 + $0x80] sm:$0xff]
    %v136 = vld [vmem:[%s3 + $0x88] sm:$0xff]
    %v137 = vld [vmem:[%s3 + $0x90] sm:$0xff]
    %v138 = vld [vmem:[%s3 + $0x98] sm:$0xff]
    %v139 = vld [vmem:[%s3 + $0xa0] sm:$0xff]
    %v140 = vld [vmem:[%s3 + $0xa8] sm:$0xff]
    %v141 = vld [vmem:[%s3 + $0xb0] sm:$0xff]
    %v142 = vld [vmem:[%s3 + $0xb8] sm:$0xff]
    %v143 = vld [vmem:[%s3 + $0xc0] sm:$0xff]
    %v144 = vld [vmem:[%s3 + $0xc8] sm:$0xff]
    %v145 = vld [vmem:[%s3 + $0xd0] sm:$0xff]
    %v146 = vld [vmem:[%s3 + $0xd8] sm:$0xff]
    %v147 = vld [vmem:[%s3 + $0xe0] sm:$0xff]
    %v148 = vld [vmem:[%s3 + $0xe8] sm:$0xff]
    %v149 = vld [vmem:[%s3 + $0xf0] sm:$0xff]
    %v150 = vld [vmem:[%s3 + $0xf8] sm:$0xff]
    %v151 = vld [vmem:[%s4] sm:$0x1]
    %v153 = vlaneseq
    %v154 = vshrl.u32 %v153, 7
    %v155 = vsub.s32 0, %v154
    %v156 = vrot.slane %v151, %v155
    %158 = vmatprep.subr.mxu0 0.0
    %159 = vmatpush1.msra.mxu0 %v134
    %160 = vmatprep.subr.mxu0 0.0
    %161 = vmatpush1.msra.mxu0 %v133
    %162 = vmatprep.subr.mxu0 0.0
    %163 = vmatpush1.msra.mxu0 %v132
    %164 = vmatprep.subr.mxu0 0.0
    %165 = vmatpush1.msra.mxu0 %v131
    %166 = vmatprep.subr.mxu0 0.0
    %167 = vmatpush1.msra.mxu0 %v130
    %168 = vmatprep.subr.mxu0 0.0
    %169 = vmatpush1.msra.mxu0 %v129
    %170 = vmatprep.subr.mxu0 0.0
    %171 = vmatpush1.msra.mxu0 %v128
    %172 = vmatprep.subr.mxu0 0.0
    %173 = vmatpush1.msra.mxu0 %v127
    %174 = vmatprep.subr.mxu0 0.0
    %175 = vmatpush1.msra.mxu0 %v126
    %176 = vmatprep.subr.mxu0 0.0
    %177 = vmatpush1.msra.mxu0 %v125
    %178 = vmatprep.subr.mxu0 0.0
    %179 = vmatpush1.msra.mxu0 %v124
    %180 = vmatprep.subr.mxu0 0.0
    %181 = vmatpush1.msra.mxu0 %v123
    %182 = vmatprep.subr.mxu0 0.0
    %183 = vmatpush1.msra.mxu0 %v122
    %184 = vmatprep.subr.mxu0 0.0
    %185 = vmatpush1.msra.mxu0 %v121
    %186 = vmatprep.subr.mxu0 0.0
    %187 = vmatpush1.msra.mxu0 %v120
    %188 = vmatprep.subr.mxu0 0.0
    %189 = vmatpush1.msra.mxu0 %v119
    %190 = vmatprep.subr.mxu0 0.0
    %191 = vmatpush2.msra.mxu0 %v150
    %192 = vmatprep.subr.mxu0 0.0
    %193 = vmatpush2.msra.mxu0 %v149
    %194 = vmatprep.subr.mxu0 0.0
    %195 = vmatpush2.msra.mxu0 %v148
    %196 = vmatprep.subr.mxu0 0.0
    %197 = vmatpush2.msra.mxu0 %v147
    %198 = vmatprep.subr.mxu0 0.0
    %199 = vmatpush2.msra.mxu0 %v146
    %200 = vmatprep.subr.mxu0 0.0
    %201 = vmatpush2.msra.mxu0 %v145
    %202 = vmatprep.subr.mxu0 0.0
    %203 = vmatpush2.msra.mxu0 %v144
    %204 = vmatprep.subr.mxu0 0.0
    %205 = vmatpush2.msra.mxu0 %v143
    %206 = vmatprep.subr.mxu0 0.0
    %207 = vmatpush2.msra.mxu0 %v142
    %208 = vmatprep.subr.mxu0 0.0
    %209 = vmatpush2.msra.mxu0 %v141
    %210 = vmatprep.subr.mxu0 0.0
    %211 = vmatpush2.msra.mxu0 %v140
    %212 = vmatprep.subr.mxu0 0.0
    %213 = vmatpush2.msra.mxu0 %v139
    %214 = vmatprep.subr.mxu0 0.0
    %215 = vmatpush2.msra.mxu0 %v138
    %216 = vmatprep.subr.mxu0 0.0
    %217 = vmatpush2.msra.mxu0 %v137
    %218 = vmatprep.subr.mxu0 0.0
    %219 = vmatpush2.msra.mxu0 %v136
    %220 = vmatprep.subr.mxu0 0.0
    %221 = vmatpush2.msra.mxu0 %v135
    %222 = vmatprep.mubr.f32.mxu0 %v118
    %223 = vmatmul.mubr.f32.gmra.mxu0 %v117
    %v224 = vpop.f32.mrf.mxu0
    %v225 = vadd.f32 %v156, %v224
    %v226 = vpop.f32.mrf.mxu0
    %227 = vdwg.mxu0
    %vm228 = vcmask 64512
    %v229 = vsel %vm228, %v225, -inf
    %230 = vmax.xlane.f32.xlu0 %v229
    %v231 = vpop.xlane.xlu0 %230
    %v232 = vsub.f32 %v225, %v231
    %v233 = vmul.f32 %v232, 1.442695
    %v234 = vpow.pop %v233
    %v235 = vsel %vm228, %v234, 0.0
    %236 = vadd.xlane.f32.xlu0 %v235
    %v237 = vpop.xlane.xlu0 %236
    %v238 = vlog2.pop %v237
    %v239 = vmul.f32 %v238, 0.6931472
    %v240 = vadd.f32 %v231, %v239
    %v241 = vrot.slane %v240, 4
    %v242 = vadd.f32 %v240, %v241
    %v243 = vrot.slane %v242, 2
    %v244 = vadd.f32 %v242, %v243
    %v245 = vrot.slane %v244, 1
    %v246 = vadd.f32 %v244, %v245
    %v247 = vrcp.pop 8.0
    %v248 = vmul.f32 %v246, %v247
    %v249 = vsub.f32 0.0, %v248
    %vm250 = vcmask 0
    %251 = vst.msk [vmem:[#allocation2] sm:$0x1] %vm250, %v249
    // Predicated region
    $region22: #{knife_forward.1} parent=1 // pred_check
      _
    $region23: #{knife_forward.1} parent=1 // pred_check_branch
      %253 = sbr.rel (0) target = $region25
    $region24: #{knife_forward.1} parent=1 // pred_region
      %s255 = ssub.s32 16, 16
      %256 = vsyncadd [#allocation3], %s255
      %s258 = sshll.u32 [#allocation2], 4
      %s259 = int_to_ptr.vmem [resolvable:$true] %s258
      %261 = dma.vmem_to_hbm [thread:$0]  %s259, 16, %s5, [#allocation3]
    $region25: #{knife_forward.1} parent=1 // pred_fallthru
      _
    // Predicated region
    $region26: #{knife_forward.1} parent=1 // pred_check
      _
    $region27: #{knife_forward.1} parent=1 // pred_check_branch
      %263 = sbr.rel (0) target = $region29
    $region28: #{knife_forward.1} parent=1 // pred_region
      %264 = dma.done [#allocation3], 16
    $region29: #{knife_forward.1} parent=1 // pred_fallthru
      _
    %265 = vsyncpa [#allocation3], 1

</llo_original>
